<compile_context>
chip_gen: v6e
topology: v6e:2x2x1
jax: 0.10.0
libtpu: 0.0.40
codegen_flags: <defaults>
</compile_context>

<pallas_src>
import jax
import jax.numpy as jnp
from jax.experimental import pallas as pl
from jax.experimental.pallas import tpu as pltpu

F = 128            # padded feature width (lane-dense)
LATENT = 64
N_BIAS_ROWS = 8    # one (8, 128) sublane block holding the 3 bias rows


# ---------------------------------------------------------------------------
# In-kernel MLP on zero-padded (BM, 128) activations.
# Padded weight rows/cols are zero, so padded activation lanes stay exactly 0
# and the first `dim` output lanes equal the un-padded computation.
# Weights are read from the resident params block per matmul (not held live).
# ---------------------------------------------------------------------------
def _mlp(y, p_ref, b1, b2, b3):
    h1 = jnp.tanh(jnp.dot(y, p_ref[0:F, :], preferred_element_type=jnp.float32) + b1)
    h2 = jnp.tanh(jnp.dot(h1, p_ref[F:2 * F, :], preferred_element_type=jnp.float32) + b2)
    return jnp.dot(h2, p_ref[2 * F:3 * F, :], preferred_element_type=jnp.float32) + b3


def _load_biases(p_ref):
    # One aligned (8,128) load; value slices afterwards (hoisted by callers).
    bias = p_ref[3 * F:3 * F + N_BIAS_ROWS, :]
    return bias[0:1, :], bias[1:2, :], bias[2:3, :]


def forward_kernel(y_ref, p_ref, o_ref):
    b1, b2, b3 = _load_biases(p_ref)
    o_ref[...] = _mlp(y_ref[...], p_ref, b1, b2, b3).astype(o_ref.dtype)


def make_euler_kernel(n_steps):
    def euler_kernel(dt_ref, y0_ref, p_ref, y_ref):
        dt = dt_ref[0]                       # SMEM scalar -> no recompile per dt
        b1, b2, b3 = _load_biases(p_ref)     # hoisted out of the step loop

        def step(_, y):
            return y + dt * _mlp(y, p_ref, b1, b2, b3)

        # Whole rollout inside the kernel: state is the fori_loop carry,
        # output written exactly once -> zero per-step grid/pipeline overhead.
        y_ref[...] = jax.lax.fori_loop(0, n_steps, step, y0_ref[...])

    return euler_kernel


# ---------------------------------------------------------------------------
# Wrappers (padding / packing happens once, outside the hot path).
# ---------------------------------------------------------------------------
def _pad_batch(y, dim):
    """Zero-pad to (ceil(b/8)*8, 128). Padding never exceeds one sublane block."""
    b = y.shape[0]
    b_pad = max(8, -(-b // 8) * 8)
    y_p = jnp.zeros((b_pad, F), jnp.float32).at[:b, :dim].set(y.astype(jnp.float32))
    return y_p, b_pad


def _choose_bm(b_pad, max_tile):
    """Batch tile that exactly divides the 8-rounded batch (no extra padding)."""
    if b_pad <= max_tile:
        return b_pad                       # single tile
    for cand in range(max_tile, 7, -8):    # largest multiple-of-8 divisor <= max_tile
        if b_pad % cand == 0:
            return cand
    return 8                               # unreachable: 8 always divides b_pad


def odefunc_forward(y, packed, dim):
    """Single evaluation of ODEFunc.forward(t, y); t is unused (as in PyTorch)."""
    b = y.shape[0]
    y_p, b_pad = _pad_batch(y, dim)
    bm = _choose_bm(b_pad, max_tile=1024)   # big lane-dense tiles amortize overhead
    grid = (b_pad // bm,)

    cost = pl.CostEstimate(
        flops=2 * b_pad * F * F * 3,
        transcendentals=2 * b_pad * F,
        bytes_accessed=4 * (2 * b_pad * F + int(packed.size)),
    )
    out = pl.pallas_call(
        forward_kernel,
        out_shape=jax.ShapeDtypeStruct((b_pad, F), jnp.float32),
        grid=grid,
        in_specs=[
            pl.BlockSpec((bm, F), lambda i: (i, 0)),
            pl.BlockSpec(packed.shape, lambda i: (0, 0)),   # params resident
        ],
        out_specs=pl.BlockSpec((bm, F), lambda i: (i, 0)),
        compiler_params=pltpu.CompilerParams(dimension_semantics=("parallel",)),
        cost_estimate=cost,
    )(y_p, packed)
    return out[:b, :dim]


def odefunc_integrate_euler(y0, packed, dim, n_steps, dt):
    """Fused explicit-Euler rollout: y_{k+1} = y_k + dt * ODEFunc(t, y_k).

    One pallas_call for the whole trajectory; the step loop runs *inside* the
    kernel (lax.fori_loop), parameters are DMA'd into VMEM once (constant
    index_map), and the only grid axis is a "parallel" batch-tile axis.
    """
    b = y0.shape[0]
    y_p, b_pad = _pad_batch(y0, dim)
    bm = _choose_bm(b_pad, max_tile=256)    # bounds resident state; >=2 tiles -> 2 TCs
    grid = (b_pad // bm,)
    dt_arr = jnp.full((1,), dt, jnp.float32)

    cost = pl.CostEstimate(
        flops=2 * b_pad * F * F * 3 * n_steps,
        transcendentals=2 * b_pad * F * n_steps,
        bytes_accessed=4 * (2 * b_pad * F + int(packed.size)),
    )
    out = pl.pallas_call(
        make_euler_kernel(int(n_steps)),
        out_shape=jax.ShapeDtypeStruct((b_pad, F), jnp.float32),
        grid=grid,
        in_specs=[
            pl.BlockSpec(memory_space=pltpu.MemorySpace.SMEM),  # dt scalar
            pl.BlockSpec((bm, F), lambda i: (i, 0)),            # y0 tile
            pl.BlockSpec(packed.shape, lambda i: (0, 0)),       # params, fetched once
        ],
        out_specs=pl.BlockSpec((bm, F), lambda i: (i, 0)),
        compiler_params=pltpu.CompilerParams(dimension_semantics=("parallel",)),
        cost_estimate=cost,
    )(dt_arr, y_p, packed)
    return out[:b, :dim]


# ---------------------------------------------------------------------------
# Parameter construction (PyTorch-equivalent init) and packing.
# ---------------------------------------------------------------------------
def init_params(key, dim, latent_dim=LATENT):
    # PyTorch: nn.init.normal_(weight, std=0.1); bias = 0.  PyTorch weight is
    # (out, in); we store the transpose (in, out) so the kernel computes x @ W.
    k1, k2, k3 = jax.random.split(key, 3)
    return {
        "w1": 0.1 * jax.random.normal(k1, (dim, latent_dim), jnp.float32),
        "w2": 0.1 * jax.random.normal(k2, (latent_dim, latent_dim), jnp.float32),
        "w3": 0.1 * jax.random.normal(k3, (latent_dim, dim), jnp.float32),
        "b1": jnp.zeros((1, latent_dim), jnp.float32),
        "b2": jnp.zeros((1, latent_dim), jnp.float32),
        "b3": jnp.zeros((1, dim), jnp.float32),
    }


def pack_params(params, dim, latent_dim=LATENT):
    """Pack all weights/biases into one zero-padded (3*128 + 8, 128) buffer."""
    buf = jnp.zeros((3 * F + N_BIAS_ROWS, F), jnp.float32)
    buf = buf.at[0:dim, 0:latent_dim].set(params["w1"])
    buf = buf.at[F:F + latent_dim, 0:latent_dim].set(params["w2"])
    buf = buf.at[2 * F:2 * F + latent_dim, 0:dim].set(params["w3"])
    buf = buf.at[3 * F + 0, 0:latent_dim].set(params["b1"].reshape(-1))
    buf = buf.at[3 * F + 1, 0:latent_dim].set(params["b2"].reshape(-1))
    buf = buf.at[3 * F + 2, 0:dim].set(params["b3"].reshape(-1))
    return buf


if __name__ == "__main__":
    dim = 17           # Mujoco state dimension implied by the module (loops over 17)
    batch = 8
    n_steps = 32
    dt = 0.02

    key = jax.random.PRNGKey(0)
    k_param, k_y = jax.random.split(key)
    params = init_params(k_param, dim)
    packed = pack_params(params, dim)
    y = jax.random.normal(k_y, (batch, dim), jnp.float32)
    t = jnp.float32(0.0)   # t is unused by the forward pass (as in the PyTorch module)

    def ref_forward(yy):
        h1 = jnp.tanh(yy @ params["w1"] + params["b1"])
        h2 = jnp.tanh(h1 @ params["w2"] + params["b2"])
        return h2 @ params["w3"] + params["b3"]

    # --- single forward pass (module's forward(t, y)) ---
    out = jax.block_until_ready(odefunc_forward(y, packed, dim))
    ref = ref_forward(y)
    assert out.shape == (batch, dim)
    assert jnp.allclose(out, ref, atol=1e-5, rtol=1e-5), float(jnp.max(jnp.abs(out - ref)))

    # --- fused Euler rollout (step loop fused inside one pallas_call) ---
    y_T = jax.block_until_ready(odefunc_integrate_euler(y, packed, dim, n_steps, dt))
    y_state = y
    for _ in range(n_steps):
        y_state = y_state + dt * ref_forward(y_state)
    assert y_T.shape == (batch, dim)
    assert jnp.allclose(y_T, y_state, atol=2e-4, rtol=2e-4), float(
        jnp.max(jnp.abs(y_T - y_state))
    )

    print("KERNEL_OK")
</pallas_src>

<mosaic_0001>
module attributes {stable_mosaic.version = 11 : i64} {
  func.func @forward_kernel(%arg0: i32, %arg1: memref<8x128xf32, #tpu.memory_space<vmem>>, %arg2: memref<392x128xf32, #tpu.memory_space<vmem>>, %arg3: memref<8x128xf32, #tpu.memory_space<vmem>>) attributes {dimension_semantics = [#tpu.dimension_semantics<parallel>], iteration_bounds = array<i64: 1>, scalar_prefetch = 0 : i64, scratch_operands = 0 : i64, tpu.core_type = #tpu.core_type<tc>, window_params = [{transform_indices = @transform_0, window_bounds = array<i64: 8, 128>}, {pipeline_mode = #tpu.pipeline_mode<synchronous>, transform_indices = @transform_1, window_bounds = array<i64: 392, 128>}, {transform_indices = @transform_2, window_bounds = array<i64: 8, 128>}]} {
    %c384 = arith.constant 384 : index
    %c0 = arith.constant 0 : index
    %0 = vector.load %arg2[%c384, %c0] : memref<392x128xf32, #tpu.memory_space<vmem>>, vector<8x128xf32>
    %1 = vector.extract_strided_slice %0 {offsets = [0, 0], sizes = [1, 128], strides = [1, 1]} : vector<8x128xf32> to vector<1x128xf32>
    %2 = vector.extract_strided_slice %0 {offsets = [1, 0], sizes = [1, 128], strides = [1, 1]} : vector<8x128xf32> to vector<1x128xf32>
    %3 = vector.extract_strided_slice %0 {offsets = [2, 0], sizes = [1, 128], strides = [1, 1]} : vector<8x128xf32> to vector<1x128xf32>
    %c0_0 = arith.constant 0 : index
    %c0_1 = arith.constant 0 : index
    %4 = vector.load %arg1[%c0_0, %c0_1] : memref<8x128xf32, #tpu.memory_space<vmem>>, vector<8x128xf32>
    %c0_2 = arith.constant 0 : index
    %c0_3 = arith.constant 0 : index
    %5 = vector.load %arg2[%c0_2, %c0_3] : memref<392x128xf32, #tpu.memory_space<vmem>>, vector<128x128xf32>
    %cst = arith.constant dense<0.000000e+00> : vector<8x128xf32>
    %6 = tpu.matmul %4, %5, %cst {dimension_numbers = #tpu.dot_dimension_numbers<[1], [0], [0], [1], [0, 0, 1, 1], [], []>} : vector<8x128xf32>, vector<128x128xf32>, vector<8x128xf32> -> vector<8x128xf32>
    %7 = vector.broadcast %1 : vector<1x128xf32> to vector<8x128xf32>
    %8 = arith.addf %6, %7 : vector<8x128xf32>
    %9 = math.tanh %8 : vector<8x128xf32>
    %c128 = arith.constant 128 : index
    %c0_4 = arith.constant 0 : index
    %10 = vector.load %arg2[%c128, %c0_4] : memref<392x128xf32, #tpu.memory_space<vmem>>, vector<128x128xf32>
    %cst_5 = arith.constant dense<0.000000e+00> : vector<8x128xf32>
    %11 = tpu.matmul %9, %10, %cst_5 {dimension_numbers = #tpu.dot_dimension_numbers<[1], [0], [0], [1], [0, 0, 1, 1], [], []>} : vector<8x128xf32>, vector<128x128xf32>, vector<8x128xf32> -> vector<8x128xf32>
    %12 = vector.broadcast %2 : vector<1x128xf32> to vector<8x128xf32>
    %13 = arith.addf %11, %12 : vector<8x128xf32>
    %14 = math.tanh %13 : vector<8x128xf32>
    %c256 = arith.constant 256 : index
    %c0_6 = arith.constant 0 : index
    %15 = vector.load %arg2[%c256, %c0_6] : memref<392x128xf32, #tpu.memory_space<vmem>>, vector<128x128xf32>
    %cst_7 = arith.constant dense<0.000000e+00> : vector<8x128xf32>
    %16 = tpu.matmul %14, %15, %cst_7 {dimension_numbers = #tpu.dot_dimension_numbers<[1], [0], [0], [1], [0, 0, 1, 1], [], []>} : vector<8x128xf32>, vector<128x128xf32>, vector<8x128xf32> -> vector<8x128xf32>
    %17 = vector.broadcast %3 : vector<1x128xf32> to vector<8x128xf32>
    %18 = arith.addf %16, %17 : vector<8x128xf32>
    %c0_8 = arith.constant 0 : index
    %c0_9 = arith.constant 0 : index
    %19 = vector.load %arg3[%c0_8, %c0_9] : memref<8x128xf32, #tpu.memory_space<vmem>>, vector<8x128xf32>
    tpu.vector_store %arg3[%c0_8, %c0_9], %18 {strides = array<i32>} : memref<8x128xf32, #tpu.memory_space<vmem>>, vector<8x128xf32>,
    return
  }
  func.func @transform_0(%arg0: i32) -> (i32, i32) {
    %c0_i32 = arith.constant 0 : i32
    %c0_i32_0 = arith.constant 0 : i32
    return %arg0, %c0_i32 : i32, i32
  }
  func.func @transform_1(%arg0: i32) -> (i32, i32) {
    %c0_i32 = arith.constant 0 : i32
    %c0_i32_0 = arith.constant 0 : i32
    %c0_i32_1 = arith.constant 0 : i32
    return %c0_i32, %c0_i32_0 : i32, i32
  }
  func.func @transform_2(%arg0: i32) -> (i32, i32) {
    %c0_i32 = arith.constant 0 : i32
    %c0_i32_0 = arith.constant 0 : i32
    return %arg0, %c0_i32 : i32, i32
  }
}

</mosaic_0001>

<llo_original>
// kernel: tpu_custom_call.1
$region0: #{tpu_custom_call.1}
  #allocation0 [shape = 'u32[]', space=smem, size = 0x4, offset = 0x4, fixed_abs, tag = 'smem constant byte address 0x4 - core index']
  #allocation1 [shape = 'u32[144,128]{1,0:T(1,128)}', space=vmem, size = 0x12000, scoped, tag = 'internal scratch']
  %s0 = inlined_call_operand.hbm [shape: f32[8,128], index: 0, kind: input, shape index: {}]
  %s1 = inlined_call_operand.hbm [shape: f32[392,128], index: 1, kind: input, shape index: {}]
  %s2 = inlined_call_operand.hbm [shape: f32[8,128], index: 2, kind: output, shape index: {}]
  %s3 = sld [smem:[#allocation0]]
  $region26: #{tpu_custom_call.1} parent=0
    _
  %s5 = ssub.s32 1, %s3
  %s6 = scalar_select 0, %s5, %s3
  $region1: #{tpu_custom_call.1} parent=0
    #allocation2 [shape = 'u8[4096]{0}', space=vmem, size = 0x1000, scoped, tag = 'input window, operand 0, single buffered']
    #allocation3 [shape = 's32[1]{0}', space=sflag, size = 0x4, scoped, tag = 'scoped memory for tpu_custom_call.1']
    #allocation4 [shape = 's32[1]{0}', space=sflag, size = 0x4, scoped, tag = 'scoped memory for tpu_custom_call.1']
    #allocation5 [shape = 'u8[200704]{0}', space=vmem, size = 0x31000, scoped, tag = 'input window, operand 1, single buffered']
    #allocation6 [shape = 's32[1]{0}', space=sflag, size = 0x4, scoped, tag = 'scoped memory for tpu_custom_call.1']
    #allocation7 [shape = 'u8[4096]{0}', space=vmem, size = 0x1000, scoped, tag = 'output window, operand 0, single buffered']
    %7 = vsyncpa [#allocation3], 0
    %8 = vsyncpa [#allocation6], 0
    %9 = vsyncpa [#allocation4], 0
    // Predicated region
    $region2: #{tpu_custom_call.1} parent=1 // pred_check
      _
    $region3: #{tpu_custom_call.1} parent=1 // pred_check_branch
      %11 = sbr.rel (0) target = $region5
    $region4: #{tpu_custom_call.1} parent=1 // pred_region
      %s13 = ssub.s32 128, 128
      %14 = vsyncadd [#allocation3], %s13
      %s16 = sshll.u32 [#allocation2], 4
      %s17 = int_to_ptr.vmem [resolvable:$true] %s16
      %19 = dma.hbm_to_vmem [thread:$0]  %s0, 128, %s17, [#allocation3]
    $region5: #{tpu_custom_call.1} parent=1 // pred_fallthru
      _
    // Predicated region
    $region6: #{tpu_custom_call.1} parent=1 // pred_check
      _
    $region7: #{tpu_custom_call.1} parent=1 // pred_check_branch
      %21 = sbr.rel (0) target = $region9
    $region8: #{tpu_custom_call.1} parent=1 // pred_region
      %s23 = ssub.s32 6272, 6272
      %24 = vsyncadd [#allocation6], %s23
      %s25 = sshll.u32 [#allocation5], 4
      %s26 = int_to_ptr.vmem [resolvable:$true] %s25
      %31 = dma.hbm_to_vmem [thread:$0]  %s1, 6272, %s26, [#allocation6], 128, 128, 8
    $region9: #{tpu_custom_call.1} parent=1 // pred_fallthru
      _
    // Predicated region
    $region10: #{tpu_custom_call.1} parent=1 // pred_check
      _
    $region11: #{tpu_custom_call.1} parent=1 // pred_check_branch
      %33 = sbr.rel (0) target = $region13
    $region12: #{tpu_custom_call.1} parent=1 // pred_region
      %34 = dma.done [#allocation3], 128
    $region13: #{tpu_custom_call.1} parent=1 // pred_fallthru
      _
    // Predicated region
    $region14: #{tpu_custom_call.1} parent=1 // pred_check
      _
    $region15: #{tpu_custom_call.1} parent=1 // pred_check_branch
      %36 = sbr.rel (0) target = $region17
    $region16: #{tpu_custom_call.1} parent=1 // pred_region
      %37 = dma.done [#allocation6], 6272
    $region17: #{tpu_custom_call.1} parent=1 // pred_fallthru
      _
    %v38 = vld [vmem:[#allocation5 + $0x180] sm:$0xff]
    %v39 = vld [vmem:[#allocation2] sm:$0xff]
    %v40 = vld [vmem:[#allocation5] sm:$0xff]
    %v41 = vld [vmem:[#allocation5 + $0x8] sm:$0xff]
    %v42 = vld [vmem:[#allocation5 + $0x10] sm:$0xff]
    %v43 = vld [vmem:[#allocation5 + $0x18] sm:$0xff]
    %v44 = vld [vmem:[#allocation5 + $0x20] sm:$0xff]
    %v45 = vld [vmem:[#allocation5 + $0x28] sm:$0xff]
    %v46 = vld [vmem:[#allocation5 + $0x30] sm:$0xff]
    %v47 = vld [vmem:[#allocation5 + $0x38] sm:$0xff]
    %v48 = vld [vmem:[#allocation5 + $0x40] sm:$0xff]
    %v49 = vld [vmem:[#allocation5 + $0x48] sm:$0xff]
    %v50 = vld [vmem:[#allocation5 + $0x50] sm:$0xff]
    %v51 = vld [vmem:[#allocation5 + $0x58] sm:$0xff]
    %v52 = vld [vmem:[#allocation5 + $0x60] sm:$0xff]
    %v53 = vld [vmem:[#allocation5 + $0x68] sm:$0xff]
    %v54 = vld [vmem:[#allocation5 + $0x70] sm:$0xff]
    %v55 = vld [vmem:[#allocation5 + $0x78] sm:$0xff]
    %v56 = vlaneseq
    %v57 = vshrl.u32 %v56, 7
    %v58 = vsub.s32 0, %v57
    %v59 = vrot.slane %v38, %v58
    %60 = vmatprep.subr.mxu0 0.0
    %61 = vmatpush1.msra.mxu0 %v55
    %62 = vmatprep.subr.mxu0 0.0
    %63 = vmatpush1.msra.mxu0 %v54
    %64 = vmatprep.subr.mxu0 0.0
    %65 = vmatpush1.msra.mxu0 %v53
    %66 = vmatprep.subr.mxu0 0.0
    %67 = vmatpush1.msra.mxu0 %v52
    %68 = vmatprep.subr.mxu0 0.0
    %69 = vmatpush1.msra.mxu0 %v51
    %70 = vmatprep.subr.mxu0 0.0
    %71 = vmatpush1.msra.mxu0 %v50
    %72 = vmatprep.subr.mxu0 0.0
    %73 = vmatpush1.msra.mxu0 %v49
    %74 = vmatprep.subr.mxu0 0.0
    %75 = vmatpush1.msra.mxu0 %v48
    %76 = vmatprep.subr.mxu0 0.0
    %77 = vmatpush1.msra.mxu0 %v47
    %78 = vmatprep.subr.mxu0 0.0
    %79 = vmatpush1.msra.mxu0 %v46
    %80 = vmatprep.subr.mxu0 0.0
    %81 = vmatpush1.msra.mxu0 %v45
    %82 = vmatprep.subr.mxu0 0.0
    %83 = vmatpush1.msra.mxu0 %v44
    %84 = vmatprep.subr.mxu0 0.0
    %85 = vmatpush1.msra.mxu0 %v43
    %86 = vmatprep.subr.mxu0 0.0
    %87 = vmatpush1.msra.mxu0 %v42
    %88 = vmatprep.subr.mxu0 0.0
    %89 = vmatpush1.msra.mxu0 %v41
    %90 = vmatprep.subr.mxu0 0.0
    %91 = vmatpush1.msra.mxu0 %v40
    %92 = vmatprep.subr.mxu0 0.0
    %93 = vmatpush2.msra.mxu0 0.0
    %94 = vmatprep.subr.mxu0 0.0
    %95 = vmatpush2.msra.mxu0 0.0
    %96 = vmatprep.subr.mxu0 0.0
    %97 = vmatpush2.msra.mxu0 0.0
    %98 = vmatprep.subr.mxu0 0.0
    %99 = vmatpush2.msra.mxu0 0.0
    %100 = vmatprep.subr.mxu0 0.0
    %101 = vmatpush2.msra.mxu0 0.0
    %102 = vmatprep.subr.mxu0 0.0
    %103 = vmatpush2.msra.mxu0 0.0
    %104 = vmatprep.subr.mxu0 0.0
    %105 = vmatpush2.msra.mxu0 0.0
    %106 = vmatprep.subr.mxu0 0.0
    %107 = vmatpush2.msra.mxu0 0.0
    %108 = vmatprep.subr.mxu0 0.0
    %109 = vmatpush2.msra.mxu0 0.0
    %110 = vmatprep.subr.mxu0 0.0
    %111 = vmatpush2.msra.mxu0 0.0
    %112 = vmatprep.subr.mxu0 0.0
    %113 = vmatpush2.msra.mxu0 0.0
    %114 = vmatprep.subr.mxu0 0.0
    %115 = vmatpush2.msra.mxu0 0.0
    %116 = vmatprep.subr.mxu0 0.0
    %117 = vmatpush2.msra.mxu0 0.0
    %118 = vmatprep.subr.mxu0 0.0
    %119 = vmatpush2.msra.mxu0 0.0
    %120 = vmatprep.subr.mxu0 0.0
    %121 = vmatpush2.msra.mxu0 0.0
    %122 = vmatprep.subr.mxu0 0.0
    %123 = vmatpush2.msra.mxu0 0.0
    %124 = vmatprep.mubr.f32.mxu0 0.0
    %125 = vmatmul.mubr.f32.gmra.mxu0 %v39
    %v126 = vpop.f32.mrf.mxu0
    %v127 = vadd.f32 %v59, %v126
    %v128 = vpop.f32.mrf.mxu0
    %129 = vdwg.mxu0
    %v130 = vtanh.pop %v127
    %v131 = vld [vmem:[#allocation5 + $0x80] sm:$0xff]
    %v132 = vld [vmem:[#allocation5 + $0x88] sm:$0xff]
    %v133 = vld [vmem:[#allocation5 + $0x90] sm:$0xff]
    %v134 = vld [vmem:[#allocation5 + $0x98] sm:$0xff]
    %v135 = vld [vmem:[#allocation5 + $0xa0] sm:$0xff]
    %v136 = vld [vmem:[#allocation5 + $0xa8] sm:$0xff]
    %v137 = vld [vmem:[#allocation5 + $0xb0] sm:$0xff]
    %v138 = vld [vmem:[#allocation5 + $0xb8] sm:$0xff]
    %v139 = vld [vmem:[#allocation5 + $0xc0] sm:$0xff]
    %v140 = vld [vmem:[#allocation5 + $0xc8] sm:$0xff]
    %v141 = vld [vmem:[#allocation5 + $0xd0] sm:$0xff]
    %v142 = vld [vmem:[#allocation5 + $0xd8] sm:$0xff]
    %v143 = vld [vmem:[#allocation5 + $0xe0] sm:$0xff]
    %v144 = vld [vmem:[#allocation5 + $0xe8] sm:$0xff]
    %v145 = vld [vmem:[#allocation5 + $0xf0] sm:$0xff]
    %v146 = vld [vmem:[#allocation5 + $0xf8] sm:$0xff]
    %v147 = vlaneseq
    %v148 = vshrl.u32 %v147, 7
    %v149 = vsub.s32 1, %v148
    %v150 = vrot.slane %v38, %v149
    %151 = vmatprep.subr.mxu0 0.0
    %152 = vmatpush1.msra.mxu0 %v146
    %153 = vmatprep.subr.mxu0 0.0
    %154 = vmatpush1.msra.mxu0 %v145
    %155 = vmatprep.subr.mxu0 0.0
    %156 = vmatpush1.msra.mxu0 %v144
    %157 = vmatprep.subr.mxu0 0.0
    %158 = vmatpush1.msra.mxu0 %v143
    %159 = vmatprep.subr.mxu0 0.0
    %160 = vmatpush1.msra.mxu0 %v142
    %161 = vmatprep.subr.mxu0 0.0
    %162 = vmatpush1.msra.mxu0 %v141
    %163 = vmatprep.subr.mxu0 0.0
    %164 = vmatpush1.msra.mxu0 %v140
    %165 = vmatprep.subr.mxu0 0.0
    %166 = vmatpush1.msra.mxu0 %v139
    %167 = vmatprep.subr.mxu0 0.0
    %168 = vmatpush1.msra.mxu0 %v138
    %169 = vmatprep.subr.mxu0 0.0
    %170 = vmatpush1.msra.mxu0 %v137
    %171 = vmatprep.subr.mxu0 0.0
    %172 = vmatpush1.msra.mxu0 %v136
    %173 = vmatprep.subr.mxu0 0.0
    %174 = vmatpush1.msra.mxu0 %v135
    %175 = vmatprep.subr.mxu0 0.0
    %176 = vmatpush1.msra.mxu0 %v134
    %177 = vmatprep.subr.mxu0 0.0
    %178 = vmatpush1.msra.mxu0 %v133
    %179 = vmatprep.subr.mxu0 0.0
    %180 = vmatpush1.msra.mxu0 %v132
    %181 = vmatprep.subr.mxu0 0.0
    %182 = vmatpush1.msra.mxu0 %v131
    %183 = vmatprep.subr.mxu0 0.0
    %184 = vmatpush2.msra.mxu0 0.0
    %185 = vmatprep.subr.mxu0 0.0
    %186 = vmatpush2.msra.mxu0 0.0
    %187 = vmatprep.subr.mxu0 0.0
    %188 = vmatpush2.msra.mxu0 0.0
    %189 = vmatprep.subr.mxu0 0.0
    %190 = vmatpush2.msra.mxu0 0.0
    %191 = vmatprep.subr.mxu0 0.0
    %192 = vmatpush2.msra.mxu0 0.0
    %193 = vmatprep.subr.mxu0 0.0
    %194 = vmatpush2.msra.mxu0 0.0
    %195 = vmatprep.subr.mxu0 0.0
    %196 = vmatpush2.msra.mxu0 0.0
    %197 = vmatprep.subr.mxu0 0.0
    %198 = vmatpush2.msra.mxu0 0.0
    %199 = vmatprep.subr.mxu0 0.0
    %200 = vmatpush2.msra.mxu0 0.0
    %201 = vmatprep.subr.mxu0 0.0
    %202 = vmatpush2.msra.mxu0 0.0
    %203 = vmatprep.subr.mxu0 0.0
    %204 = vmatpush2.msra.mxu0 0.0
    %205 = vmatprep.subr.mxu0 0.0
    %206 = vmatpush2.msra.mxu0 0.0
    %207 = vmatprep.subr.mxu0 0.0
    %208 = vmatpush2.msra.mxu0 0.0
    %209 = vmatprep.subr.mxu0 0.0
    %210 = vmatpush2.msra.mxu0 0.0
    %211 = vmatprep.subr.mxu0 0.0
    %212 = vmatpush2.msra.mxu0 0.0
    %213 = vmatprep.subr.mxu0 0.0
    %214 = vmatpush2.msra.mxu0 0.0
    %215 = vmatprep.mubr.f32.mxu0 0.0
    %216 = vmatmul.mubr.f32.gmra.mxu0 %v130
    %v217 = vpop.f32.mrf.mxu0
    %v218 = vadd.f32 %v150, %v217
    %v219 = vpop.f32.mrf.mxu0
    %220 = vdwg.mxu0
    %v221 = vtanh.pop %v218
    %v222 = vld [vmem:[#allocation5 + $0x100] sm:$0xff]
    %v223 = vld [vmem:[#allocation5 + $0x108] sm:$0xff]
    %v224 = vld [vmem:[#allocation5 + $0x110] sm:$0xff]
    %v225 = vld [vmem:[#allocation5 + $0x118] sm:$0xff]
    %v226 = vld [vmem:[#allocation5 + $0x120] sm:$0xff]
    %v227 = vld [vmem:[#allocation5 + $0x128] sm:$0xff]
    %v228 = vld [vmem:[#allocation5 + $0x130] sm:$0xff]
    %v229 = vld [vmem:[#allocation5 + $0x138] sm:$0xff]
    %v230 = vld [vmem:[#allocation5 + $0x140] sm:$0xff]
    %v231 = vld [vmem:[#allocation5 + $0x148] sm:$0xff]
    %v232 = vld [vmem:[#allocation5 + $0x150] sm:$0xff]
    %v233 = vld [vmem:[#allocation5 + $0x158] sm:$0xff]
    %v234 = vld [vmem:[#allocation5 + $0x160] sm:$0xff]
    %v235 = vld [vmem:[#allocation5 + $0x168] sm:$0xff]
    %v236 = vld [vmem:[#allocation5 + $0x170] sm:$0xff]
    %v237 = vld [vmem:[#allocation5 + $0x178] sm:$0xff]
    %v238 = vlaneseq
    %v239 = vshrl.u32 %v238, 7
    %v240 = vsub.s32 2, %v239
    %v241 = vrot.slane %v38, %v240
    %242 = vmatprep.subr.mxu0 0.0
    %243 = vmatpush1.msra.mxu0 %v237
    %244 = vmatprep.subr.mxu0 0.0
    %245 = vmatpush1.msra.mxu0 %v236
    %246 = vmatprep.subr.mxu0 0.0
    %247 = vmatpush1.msra.mxu0 %v235
    %248 = vmatprep.subr.mxu0 0.0
    %249 = vmatpush1.msra.mxu0 %v234
    %250 = vmatprep.subr.mxu0 0.0
    %251 = vmatpush1.msra.mxu0 %v233
    %252 = vmatprep.subr.mxu0 0.0
    %253 = vmatpush1.msra.mxu0 %v232
    %254 = vmatprep.subr.mxu0 0.0
    %255 = vmatpush1.msra.mxu0 %v231
    %256 = vmatprep.subr.mxu0 0.0
    %257 = vmatpush1.msra.mxu0 %v230
    %258 = vmatprep.subr.mxu0 0.0
    %259 = vmatpush1.msra.mxu0 %v229
    %260 = vmatprep.subr.mxu0 0.0
    %261 = vmatpush1.msra.mxu0 %v228
    %262 = vmatprep.subr.mxu0 0.0
    %263 = vmatpush1.msra.mxu0 %v227
    %264 = vmatprep.subr.mxu0 0.0
    %265 = vmatpush1.msra.mxu0 %v226
    %266 = vmatprep.subr.mxu0 0.0
    %267 = vmatpush1.msra.mxu0 %v225
    %268 = vmatprep.subr.mxu0 0.0
    %269 = vmatpush1.msra.mxu0 %v224
    %270 = vmatprep.subr.mxu0 0.0
    %271 = vmatpush1.msra.mxu0 %v223
    %272 = vmatprep.subr.mxu0 0.0
    %273 = vmatpush1.msra.mxu0 %v222
    %274 = vmatprep.subr.mxu0 0.0
    %275 = vmatpush2.msra.mxu0 0.0
    %276 = vmatprep.subr.mxu0 0.0
    %277 = vmatpush2.msra.mxu0 0.0
    %278 = vmatprep.subr.mxu0 0.0
    %279 = vmatpush2.msra.mxu0 0.0
    %280 = vmatprep.subr.mxu0 0.0
    %281 = vmatpush2.msra.mxu0 0.0
    %282 = vmatprep.subr.mxu0 0.0
    %283 = vmatpush2.msra.mxu0 0.0
    %284 = vmatprep.subr.mxu0 0.0
    %285 = vmatpush2.msra.mxu0 0.0
    %286 = vmatprep.subr.mxu0 0.0
    %287 = vmatpush2.msra.mxu0 0.0
    %288 = vmatprep.subr.mxu0 0.0
    %289 = vmatpush2.msra.mxu0 0.0
    %290 = vmatprep.subr.mxu0 0.0
    %291 = vmatpush2.msra.mxu0 0.0
    %292 = vmatprep.subr.mxu0 0.0
    %293 = vmatpush2.msra.mxu0 0.0
    %294 = vmatprep.subr.mxu0 0.0
    %295 = vmatpush2.msra.mxu0 0.0
    %296 = vmatprep.subr.mxu0 0.0
    %297 = vmatpush2.msra.mxu0 0.0
    %298 = vmatprep.subr.mxu0 0.0
    %299 = vmatpush2.msra.mxu0 0.0
    %300 = vmatprep.subr.mxu0 0.0
    %301 = vmatpush2.msra.mxu0 0.0
    %302 = vmatprep.subr.mxu0 0.0
    %303 = vmatpush2.msra.mxu0 0.0
    %304 = vmatprep.subr.mxu0 0.0
    %305 = vmatpush2.msra.mxu0 0.0
    %306 = vmatprep.mubr.f32.mxu0 0.0
    %307 = vmatmul.mubr.f32.gmra.mxu0 %v221
    %v308 = vpop.f32.mrf.mxu0
    %v309 = vadd.f32 %v241, %v308
    %v310 = vpop.f32.mrf.mxu0
    %311 = vdwg.mxu0
    %312 = vst [vmem:[#allocation7] sm:$0xff] %v309
    // Predicated region
    $region18: #{tpu_custom_call.1} parent=1 // pred_check
      _
    $region19: #{tpu_custom_call.1} parent=1 // pred_check_branch
      %314 = sbr.rel (0) target = $region21
    $region20: #{tpu_custom_call.1} parent=1 // pred_region
      %s316 = ssub.s32 128, 128
      %317 = vsyncadd [#allocation4], %s316
      %s319 = sshll.u32 [#allocation7], 4
      %s320 = int_to_ptr.vmem [resolvable:$true] %s319
      %322 = dma.vmem_to_hbm [thread:$0]  %s320, 128, %s2, [#allocation4]
    $region21: #{tpu_custom_call.1} parent=1 // pred_fallthru
      _
    // Predicated region
    $region22: #{tpu_custom_call.1} parent=1 // pred_check
      _
    $region23: #{tpu_custom_call.1} parent=1 // pred_check_branch
      %324 = sbr.rel (0) target = $region25
    $region24: #{tpu_custom_call.1} parent=1 // pred_region
      %325 = dma.done [#allocation4], 128
    $region25: #{tpu_custom_call.1} parent=1 // pred_fallthru
      _
    %326 = vsyncpa [#allocation3], 1
    %327 = vsyncpa [#allocation6], 1
    %328 = vsyncpa [#allocation4], 1

</llo_original>
